<compile_context>
chip_gen: v7x
topology: tpu7x:2x2x1
jax: 0.10.0
libtpu: 0.0.40
codegen_flags: <defaults>
</compile_context>

<pallas_src>
import jax
import jax.numpy as jnp
from jax.experimental import pallas as pl
from jax.experimental.pallas import tpu as pltpu

condition_dim = 2
latent_dim = 20

_HIDDEN = 128
_LANE = 128
_SUBLANE = 8


def _round_up(x, m):
    return ((x + m - 1) // m) * m


def _decoder_kernel(z_ref, c_ref, w1z_ref, w1c_ref, b1_ref, w2_ref, b2_ref, o_ref):
    # fc1, latent part: MXU matmul with f32 accumulation.
    h = jnp.dot(z_ref[...], w1z_ref[...], preferred_element_type=jnp.float32)

    # fc1, condition part: K == condition_dim (tiny) -> VPU broadcast-FMAs
    # instead of a second MXU push/pop.  Static Python loop, unrolled at trace.
    c = c_ref[...]
    w1c = w1c_ref[...]
    for j in range(c.shape[1]):
        h = h + c[:, j:j + 1] * w1c[j:j + 1, :]

    h = jnp.maximum(h + b1_ref[...], 0.0)                        # bias + relu (f32)

    # fc2 + sigmoid; stored unpadded (masked lane stores are cheap vs. the
    # saved output HBM writeback).
    y = jnp.dot(h, w2_ref[...], preferred_element_type=jnp.float32) + b2_ref[...]
    o_ref[...] = jax.nn.sigmoid(y).astype(o_ref.dtype)


def decoder_forward(z, condition, params, *, tile_b=4096):
    """Pallas-backed equivalent of Decoder.forward.

    z:         (B, latent_dim)    float32
    condition: (B, condition_dim) float32
    params:    dict with w1 (latent+cond, 128), b1 (1, 128),
                         w2 (128, out_dim),     b2 (1, out_dim)
    """
    B, lat = z.shape
    cnd = condition.shape[1]
    hid = params["w1"].shape[1]
    out_dim = params["w2"].shape[1]

    # --- static parameter prep (trace-time; no runtime HBM round-trip) ---
    w1_z = params["w1"][:lat]          # (lat, hid)
    w1_c = params["w1"][lat:]          # (cnd, hid)
    b1 = params["b1"]                  # (1, hid)
    w2 = params["w2"]                  # (hid, out_dim)  -- NOT lane-padded
    b2 = params["b2"]                  # (1, out_dim)

    # --- batch tiling: no input padding; ragged last block is masked ---
    tile_b = int(tile_b)
    tile_b = max(_SUBLANE, _round_up(min(tile_b, B), _SUBLANE))
    # Prefer >= 2 grid steps (v7x has 2 TensorCores; also keeps the input
    # prefetch pipeline busy) once the batch is big enough to split.
    if B > 2 * _SUBLANE and pl.cdiv(B, tile_b) < 2:
        tile_b = max(_SUBLANE, _round_up(pl.cdiv(B, 2), _SUBLANE))
    grid = (pl.cdiv(B, tile_b),)

    # --- VMEM budget with lane-padded ((8,128)-tiled) widths ---
    f32 = 4

    def vrow(cols):  # bytes per row of an f32 block as laid out in VMEM
        return _round_up(cols, _LANE) * f32

    tile_bytes = 2 * tile_b * (vrow(lat) + vrow(cnd) + vrow(out_dim))   # dbl-buffered tiles
    tile_bytes += tile_b * vrow(hid)                                     # hidden activations
    w_bytes = 2 * (
        _round_up(lat, _SUBLANE) * vrow(hid)
        + _round_up(cnd, _SUBLANE) * vrow(hid)
        + _SUBLANE * vrow(hid)
        + _round_up(hid, _SUBLANE) * vrow(out_dim)
        + _SUBLANE * vrow(out_dim)
    )
    vmem_budget = tile_bytes + w_bytes + (4 << 20)                       # headroom
    vmem_budget = int(min(max(vmem_budget, 16 << 20), 48 << 20))         # v7x-safe cap

    out = pl.pallas_call(
        _decoder_kernel,
        out_shape=jax.ShapeDtypeStruct((B, out_dim), jnp.float32),
        grid_spec=pltpu.PrefetchScalarGridSpec(
            num_scalar_prefetch=0,
            grid=grid,
            in_specs=[
                pl.BlockSpec((tile_b, lat), lambda i: (i, 0)),   # z tile
                pl.BlockSpec((tile_b, cnd), lambda i: (i, 0)),   # condition tile
                pl.BlockSpec((lat, hid), lambda i: (0, 0)),      # w1_z (resident)
                pl.BlockSpec((cnd, hid), lambda i: (0, 0)),      # w1_c (resident)
                pl.BlockSpec((1, hid), lambda i: (0, 0)),        # b1   (resident)
                pl.BlockSpec((hid, out_dim), lambda i: (0, 0)),  # w2   (resident)
                pl.BlockSpec((1, out_dim), lambda i: (0, 0)),    # b2   (resident)
            ],
            out_specs=pl.BlockSpec((tile_b, out_dim), lambda i: (i, 0)),
        ),
        compiler_params=pltpu.CompilerParams(
            dimension_semantics=("parallel",),
            vmem_limit_bytes=vmem_budget,
        ),
    )(z, condition, w1_z, w1_c, b1, w2, b2)

    return out


def init_decoder_params(key, latent_dim, output_dim, condition_dim):
    """Deterministic synthetic init matching nn.Linear shapes (W stored transposed)."""
    in1 = latent_dim + condition_dim
    hid = _HIDDEN
    k1, k2, k3, k4 = jax.random.split(key, 4)
    lim1 = 1.0 / jnp.sqrt(jnp.float32(in1))
    lim2 = 1.0 / jnp.sqrt(jnp.float32(hid))
    return {
        "w1": jax.random.uniform(k1, (in1, hid), jnp.float32, -lim1, lim1),
        "b1": jax.random.uniform(k2, (1, hid), jnp.float32, -lim1, lim1),
        "w2": jax.random.uniform(k3, (hid, output_dim), jnp.float32, -lim2, lim2),
        "b2": jax.random.uniform(k4, (1, output_dim), jnp.float32, -lim2, lim2),
    }


def _reference_forward(z, condition, params):
    zc = jnp.concatenate([z, condition], axis=-1)
    h = jnp.maximum(zc @ params["w1"] + params["b1"], 0.0)
    return jax.nn.sigmoid(h @ params["w2"] + params["b2"])


if __name__ == "__main__":
    key = jax.random.PRNGKey(0)
    k_params, k_z, k_c, k_z2, k_c2 = jax.random.split(key, 5)

    output_dim = 32
    params = init_decoder_params(k_params, latent_dim, output_dim, condition_dim)

    # Test 1: small batch, single grid step.
    batch = 8
    z = jax.random.normal(k_z, (batch, latent_dim), jnp.float32)
    condition = jax.random.normal(k_c, (batch, condition_dim), jnp.float32)
    out = jax.block_until_ready(decoder_forward(z, condition, params))
    ref = _reference_forward(z, condition, params)
    assert out.shape == (batch, output_dim)
    assert jnp.allclose(out, ref, atol=1e-5, rtol=1e-5)

    # Test 2: non-multiple-of-tile batch + multi-step grid (exercises the
    # ragged, masked last block with tile_b=8 -> tail of 4 rows).
    batch2 = 20
    z2 = jax.random.normal(k_z2, (batch2, latent_dim), jnp.float32)
    condition2 = jax.random.normal(k_c2, (batch2, condition_dim), jnp.float32)
    out2 = jax.block_until_ready(decoder_forward(z2, condition2, params, tile_b=8))
    ref2 = _reference_forward(z2, condition2, params)
    assert out2.shape == (batch2, output_dim)
    assert jnp.allclose(out2, ref2, atol=1e-5, rtol=1e-5)

    # Test 3: default tile_b on a batch that triggers the ">= 2 grid steps"
    # heuristic (tile_b clamps to 16 -> grid 2, ragged tail of 4 rows).
    out3 = jax.block_until_ready(decoder_forward(z2, condition2, params))
    assert out3.shape == (batch2, output_dim)
    assert jnp.allclose(out3, ref2, atol=1e-5, rtol=1e-5)

    print("KERNEL_OK")
</pallas_src>

<mosaic_0001>
module attributes {stable_mosaic.version = 11 : i64} {
  func.func @_decoder_kernel(%arg0: i32, %arg1: memref<8x20xf32, #tpu.memory_space<vmem>>, %arg2: memref<8x2xf32, #tpu.memory_space<vmem>>, %arg3: memref<20x128xf32, #tpu.memory_space<vmem>>, %arg4: memref<2x128xf32, #tpu.memory_space<vmem>>, %arg5: memref<1x128xf32, #tpu.memory_space<vmem>>, %arg6: memref<128x32xf32, #tpu.memory_space<vmem>>, %arg7: memref<1x32xf32, #tpu.memory_space<vmem>>, %arg8: memref<8x32xf32, #tpu.memory_space<vmem>>) attributes {dimension_semantics = [#tpu.dimension_semantics<parallel>], iteration_bounds = array<i64: 1>, scalar_prefetch = 0 : i64, scratch_operands = 0 : i64, tpu.core_type = #tpu.core_type<tc>, window_params = [{transform_indices = @transform_0, window_bounds = array<i64: 8, 20>}, {transform_indices = @transform_1, window_bounds = array<i64: 8, 2>}, {pipeline_mode = #tpu.pipeline_mode<synchronous>, transform_indices = @transform_2, window_bounds = array<i64: 20, 128>}, {pipeline_mode = #tpu.pipeline_mode<synchronous>, transform_indices = @transform_3, window_bounds = array<i64: 2, 128>}, {pipeline_mode = #tpu.pipeline_mode<synchronous>, transform_indices = @transform_4, window_bounds = array<i64: 1, 128>}, {pipeline_mode = #tpu.pipeline_mode<synchronous>, transform_indices = @transform_5, window_bounds = array<i64: 128, 32>}, {pipeline_mode = #tpu.pipeline_mode<synchronous>, transform_indices = @transform_6, window_bounds = array<i64: 1, 32>}, {transform_indices = @transform_7, window_bounds = array<i64: 8, 32>}]} {
    %c0 = arith.constant 0 : index
    %c0_0 = arith.constant 0 : index
    %0 = vector.load %arg1[%c0, %c0_0] : memref<8x20xf32, #tpu.memory_space<vmem>>, vector<8x20xf32>
    %c0_1 = arith.constant 0 : index
    %c0_2 = arith.constant 0 : index
    %1 = vector.load %arg3[%c0_1, %c0_2] : memref<20x128xf32, #tpu.memory_space<vmem>>, vector<20x128xf32>
    %cst = arith.constant dense<0.000000e+00> : vector<8x128xf32>
    %2 = tpu.matmul %0, %1, %cst {dimension_numbers = #tpu.dot_dimension_numbers<[1], [0], [0], [1], [0, 0, 1, 1], [], []>} : vector<8x20xf32>, vector<20x128xf32>, vector<8x128xf32> -> vector<8x128xf32>
    %c0_3 = arith.constant 0 : index
    %c0_4 = arith.constant 0 : index
    %3 = vector.load %arg2[%c0_3, %c0_4] : memref<8x2xf32, #tpu.memory_space<vmem>>, vector<8x2xf32>
    %c0_5 = arith.constant 0 : index
    %c0_6 = arith.constant 0 : index
    %4 = vector.load %arg4[%c0_5, %c0_6] : memref<2x128xf32, #tpu.memory_space<vmem>>, vector<2x128xf32>
    %5 = vector.extract_strided_slice %3 {offsets = [0, 0], sizes = [8, 1], strides = [1, 1]} : vector<8x2xf32> to vector<8x1xf32>
    %6 = vector.extract_strided_slice %4 {offsets = [0, 0], sizes = [1, 128], strides = [1, 1]} : vector<2x128xf32> to vector<1x128xf32>
    %7 = vector.broadcast %5 : vector<8x1xf32> to vector<8x128xf32>
    %8 = vector.broadcast %6 : vector<1x128xf32> to vector<8x128xf32>
    %9 = arith.mulf %7, %8 : vector<8x128xf32>
    %10 = arith.addf %2, %9 : vector<8x128xf32>
    %11 = vector.extract_strided_slice %3 {offsets = [0, 1], sizes = [8, 1], strides = [1, 1]} : vector<8x2xf32> to vector<8x1xf32>
    %12 = vector.extract_strided_slice %4 {offsets = [1, 0], sizes = [1, 128], strides = [1, 1]} : vector<2x128xf32> to vector<1x128xf32>
    %13 = vector.broadcast %11 : vector<8x1xf32> to vector<8x128xf32>
    %14 = vector.broadcast %12 : vector<1x128xf32> to vector<8x128xf32>
    %15 = arith.mulf %13, %14 : vector<8x128xf32>
    %16 = arith.addf %10, %15 : vector<8x128xf32>
    %c0_7 = arith.constant 0 : index
    %c0_8 = arith.constant 0 : index
    %17 = vector.load %arg5[%c0_7, %c0_8] : memref<1x128xf32, #tpu.memory_space<vmem>>, vector<1x128xf32>
    %18 = vector.broadcast %17 : vector<1x128xf32> to vector<8x128xf32>
    %19 = arith.addf %16, %18 : vector<8x128xf32>
    %cst_9 = arith.constant 0.000000e+00 : f32
    %20 = vector.broadcast %cst_9 : f32 to vector<8x128xf32>
    %21 = arith.maximumf %19, %20 : vector<8x128xf32>
    %c0_10 = arith.constant 0 : index
    %c0_11 = arith.constant 0 : index
    %22 = vector.load %arg6[%c0_10, %c0_11] : memref<128x32xf32, #tpu.memory_space<vmem>>, vector<128x32xf32>
    %cst_12 = arith.constant dense<0.000000e+00> : vector<8x32xf32>
    %23 = tpu.matmul %21, %22, %cst_12 {dimension_numbers = #tpu.dot_dimension_numbers<[1], [0], [0], [1], [0, 0, 1, 1], [], []>} : vector<8x128xf32>, vector<128x32xf32>, vector<8x32xf32> -> vector<8x32xf32>
    %c0_13 = arith.constant 0 : index
    %c0_14 = arith.constant 0 : index
    %24 = vector.load %arg7[%c0_13, %c0_14] : memref<1x32xf32, #tpu.memory_space<vmem>>, vector<1x32xf32>
    %25 = vector.broadcast %24 : vector<1x32xf32> to vector<8x32xf32>
    %26 = arith.addf %23, %25 : vector<8x32xf32>
    %27 = arith.negf %26 : vector<8x32xf32>
    %28 = math.exp %27 : vector<8x32xf32>
    %cst_15 = arith.constant 1.000000e+00 : f32
    %29 = vector.broadcast %cst_15 : f32 to vector<8x32xf32>
    %30 = arith.addf %29, %28 : vector<8x32xf32>
    %31 = arith.divf %29, %30 : vector<8x32xf32>
    %c0_16 = arith.constant 0 : index
    %c0_17 = arith.constant 0 : index
    %32 = vector.load %arg8[%c0_16, %c0_17] : memref<8x32xf32, #tpu.memory_space<vmem>>, vector<8x32xf32>
    tpu.vector_store %arg8[%c0_16, %c0_17], %31 {strides = array<i32>} : memref<8x32xf32, #tpu.memory_space<vmem>>, vector<8x32xf32>,
    return
  }
  func.func @transform_0(%arg0: i32) -> (i32, i32) {
    %c0_i32 = arith.constant 0 : i32
    %c0_i32_0 = arith.constant 0 : i32
    return %arg0, %c0_i32 : i32, i32
  }
  func.func @transform_1(%arg0: i32) -> (i32, i32) {
    %c0_i32 = arith.constant 0 : i32
    %c0_i32_0 = arith.constant 0 : i32
    return %arg0, %c0_i32 : i32, i32
  }
  func.func @transform_2(%arg0: i32) -> (i32, i32) {
    %c0_i32 = arith.constant 0 : i32
    %c0_i32_0 = arith.constant 0 : i32
    %c0_i32_1 = arith.constant 0 : i32
    return %c0_i32, %c0_i32_0 : i32, i32
  }
  func.func @transform_3(%arg0: i32) -> (i32, i32) {
    %c0_i32 = arith.constant 0 : i32
    %c0_i32_0 = arith.constant 0 : i32
    %c0_i32_1 = arith.constant 0 : i32
    return %c0_i32, %c0_i32_0 : i32, i32
  }
  func.func @transform_4(%arg0: i32) -> (i32, i32) {
    %c0_i32 = arith.constant 0 : i32
    %c0_i32_0 = arith.constant 0 : i32
    %c0_i32_1 = arith.constant 0 : i32
    return %c0_i32, %c0_i32_0 : i32, i32
  }
  func.func @transform_5(%arg0: i32) -> (i32, i32) {
    %c0_i32 = arith.constant 0 : i32
    %c0_i32_0 = arith.constant 0 : i32
    %c0_i32_1 = arith.constant 0 : i32
    return %c0_i32, %c0_i32_0 : i32, i32
  }
  func.func @transform_6(%arg0: i32) -> (i32, i32) {
    %c0_i32 = arith.constant 0 : i32
    %c0_i32_0 = arith.constant 0 : i32
    %c0_i32_1 = arith.constant 0 : i32
    return %c0_i32, %c0_i32_0 : i32, i32
  }
  func.func @transform_7(%arg0: i32) -> (i32, i32) {
    %c0_i32 = arith.constant 0 : i32
    %c0_i32_0 = arith.constant 0 : i32
    return %arg0, %c0_i32 : i32, i32
  }
}

</mosaic_0001>

<llo_original>
// kernel: tpu_custom_call.1
$region0: #{tpu_custom_call.1}
  #allocation0 [shape = 'u32[]', space=smem, size = 0x4, offset = 0x4, fixed_abs, tag = 'smem constant byte address 0x4 - core index']
  #allocation1 [shape = 'u32[144,128]{1,0:T(1,128)}', space=vmem, size = 0x12000, scoped, tag = 'internal scratch']
  %s0 = inlined_call_operand.vmem [shape: f32[8,20], index: 0, kind: input, shape index: {}]
  %s1 = inlined_call_operand.vmem [shape: f32[8,2], index: 1, kind: input, shape index: {}]
  %s2 = inlined_call_operand.vmem [shape: f32[20,128], index: 2, kind: input, shape index: {}]
  %s3 = inlined_call_operand.vmem [shape: f32[2,128], index: 3, kind: input, shape index: {}]
  %s4 = inlined_call_operand.vmem [shape: f32[1,128], index: 4, kind: input, shape index: {}]
  %s5 = inlined_call_operand.vmem [shape: f32[128,32], index: 5, kind: input, shape index: {}]
  %s6 = inlined_call_operand.vmem [shape: f32[1,32], index: 6, kind: input, shape index: {}]
  %s7 = inlined_call_operand.hbm [shape: f32[8,32], index: 7, kind: output, shape index: {}]
  %s8 = sld [smem:[#allocation0]]
  $region38: #{tpu_custom_call.1} parent=0
    _
  %s10 = ssub.s32 1, %s8
  %s11 = scalar_select 0, %s10, %s8
  $region1: #{tpu_custom_call.1} parent=0
    #allocation2 [shape = 'u8[4096]{0}', space=vmem, size = 0x1000, scoped, tag = 'output window, operand 0, single buffered']
    #allocation3 [shape = 's32[1]{0}', space=sflag, size = 0x4, scoped, tag = 'scoped memory for tpu_custom_call.1']
    %12 = vsyncpa [#allocation3], 0
    // Predicated region
    $region2: #{tpu_custom_call.1} parent=1 // pred_check
      _
    $region3: #{tpu_custom_call.1} parent=1 // pred_check_branch
      %14 = sbr.rel (0) target = $region5
    $region4: #{tpu_custom_call.1} parent=1 // pred_region
      _
    $region5: #{tpu_custom_call.1} parent=1 // pred_fallthru
      _
    // Predicated region
    $region6: #{tpu_custom_call.1} parent=1 // pred_check
      _
    $region7: #{tpu_custom_call.1} parent=1 // pred_check_branch
      %16 = sbr.rel (0) target = $region9
    $region8: #{tpu_custom_call.1} parent=1 // pred_region
      _
    $region9: #{tpu_custom_call.1} parent=1 // pred_fallthru
      _
    // Predicated region
    $region10: #{tpu_custom_call.1} parent=1 // pred_check
      _
    $region11: #{tpu_custom_call.1} parent=1 // pred_check_branch
      %18 = sbr.rel (0) target = $region13
    $region12: #{tpu_custom_call.1} parent=1 // pred_region
      _
    $region13: #{tpu_custom_call.1} parent=1 // pred_fallthru
      _
    // Predicated region
    $region14: #{tpu_custom_call.1} parent=1 // pred_check
      _
    $region15: #{tpu_custom_call.1} parent=1 // pred_check_branch
      %20 = sbr.rel (0) target = $region17
    $region16: #{tpu_custom_call.1} parent=1 // pred_region
      _
    $region17: #{tpu_custom_call.1} parent=1 // pred_fallthru
      _
    // Predicated region
    $region18: #{tpu_custom_call.1} parent=1 // pred_check
      _
    $region19: #{tpu_custom_call.1} parent=1 // pred_check_branch
      %22 = sbr.rel (0) target = $region21
    $region20: #{tpu_custom_call.1} parent=1 // pred_region
      _
    $region21: #{tpu_custom_call.1} parent=1 // pred_fallthru
      _
    // Predicated region
    $region22: #{tpu_custom_call.1} parent=1 // pred_check
      _
    $region23: #{tpu_custom_call.1} parent=1 // pred_check_branch
      %24 = sbr.rel (0) target = $region25
    $region24: #{tpu_custom_call.1} parent=1 // pred_region
      _
    $region25: #{tpu_custom_call.1} parent=1 // pred_fallthru
      _
    // Predicated region
    $region26: #{tpu_custom_call.1} parent=1 // pred_check
      _
    $region27: #{tpu_custom_call.1} parent=1 // pred_check_branch
      %26 = sbr.rel (0) target = $region29
    $region28: #{tpu_custom_call.1} parent=1 // pred_region
      _
    $region29: #{tpu_custom_call.1} parent=1 // pred_fallthru
      _
    %v27 = vld [vmem:[%s0] sm:$0xff]
    %v28 = vld [vmem:[%s2] sm:$0xff]
    %v29 = vld [vmem:[%s2 + $0x8] sm:$0xff]
    %v30 = vld [vmem:[%s2 + $0x10] sm:$0xf]
    %v31 = vld [vmem:[%s1] sm:$0xff]
    %v32 = vld [vmem:[%s3] sm:$0x3]
    %34 = vset.pattern.permute.xlu0 0
    %35 = vperm.xlu0 %34, %v31
    %v36 = vpop.permute.xlu0 %35
    %v38 = vlaneseq
    %v39 = vshrl.u32 %v38, 7
    %v40 = vsub.s32 0, %v39
    %v41 = vrot.slane %v32, %v40
    %v42 = vmul.f32 %v36, %v41
    %vm43 = vcmask 162816
    %v45 = vsel %vm43, %v27, 0
    %vm47 = vcmask 1043456
    %v49 = vsel %vm47, %v30, 0
    %51 = vmatprep.subr.mxu0 0.0
    %52 = vmatpush1.msra.mxu0 %v28
    %53 = vmatprep.subr.mxu0 0.0
    %54 = vmatpush1.msra.mxu0 %v29
    %55 = vmatprep.subr.mxu0 0.0
    %56 = vmatpush1.msra.mxu0 %v49
    %57 = vmatprep.subr.mxu0 0.0
    %58 = vmatpush1.msra.mxu0 0.0
    %59 = vmatprep.subr.mxu0 0.0
    %60 = vmatpush1.msra.mxu0 0.0
    %61 = vmatprep.subr.mxu0 0.0
    %62 = vmatpush1.msra.mxu0 0.0
    %63 = vmatprep.subr.mxu0 0.0
    %64 = vmatpush1.msra.mxu0 0.0
    %65 = vmatprep.subr.mxu0 0.0
    %66 = vmatpush1.msra.mxu0 0.0
    %67 = vmatprep.subr.mxu0 0.0
    %68 = vmatpush1.msra.mxu0 0.0
    %69 = vmatprep.subr.mxu0 0.0
    %70 = vmatpush1.msra.mxu0 0.0
    %71 = vmatprep.subr.mxu0 0.0
    %72 = vmatpush1.msra.mxu0 0.0
    %73 = vmatprep.subr.mxu0 0.0
    %74 = vmatpush1.msra.mxu0 0.0
    %75 = vmatprep.subr.mxu0 0.0
    %76 = vmatpush1.msra.mxu0 0.0
    %77 = vmatprep.subr.mxu0 0.0
    %78 = vmatpush1.msra.mxu0 0.0
    %79 = vmatprep.subr.mxu0 0.0
    %80 = vmatpush1.msra.mxu0 0.0
    %81 = vmatprep.subr.mxu0 0.0
    %82 = vmatpush1.msra.mxu0 0.0
    %83 = vmatprep.subr.mxu0 0.0
    %84 = vmatpush1.msra.mxu0 0.0
    %85 = vmatprep.subr.mxu0 0.0
    %86 = vmatpush1.msra.mxu0 0.0
    %87 = vmatprep.subr.mxu0 0.0
    %88 = vmatpush1.msra.mxu0 0.0
    %89 = vmatprep.subr.mxu0 0.0
    %90 = vmatpush1.msra.mxu0 0.0
    %91 = vmatprep.subr.mxu0 0.0
    %92 = vmatpush1.msra.mxu0 0.0
    %93 = vmatprep.subr.mxu0 0.0
    %94 = vmatpush1.msra.mxu0 0.0
    %95 = vmatprep.subr.mxu0 0.0
    %96 = vmatpush1.msra.mxu0 0.0
    %97 = vmatprep.subr.mxu0 0.0
    %98 = vmatpush1.msra.mxu0 0.0
    %99 = vmatprep.subr.mxu0 0.0
    %100 = vmatpush1.msra.mxu0 0.0
    %101 = vmatprep.subr.mxu0 0.0
    %102 = vmatpush1.msra.mxu0 0.0
    %103 = vmatprep.subr.mxu0 0.0
    %104 = vmatpush1.msra.mxu0 0.0
    %105 = vmatprep.subr.mxu0 0.0
    %106 = vmatpush1.msra.mxu0 0.0
    %107 = vmatprep.subr.mxu0 0.0
    %108 = vmatpush1.msra.mxu0 0.0
    %109 = vmatprep.subr.mxu0 0.0
    %110 = vmatpush1.msra.mxu0 0.0
    %111 = vmatprep.subr.mxu0 0.0
    %112 = vmatpush1.msra.mxu0 0.0
    %113 = vmatprep.subr.mxu0 0.0
    %114 = vmatpush1.msra.mxu0 0.0
    %115 = vmatprep.mubr.f32.mxu0 0.0
    %116 = vmatmul.mubr.f32.gmra.mrb[0].mxu0 %v45
    %v117 = vpop.f32.mrb[0].mxu0
    %v118 = vadd.f32 %v42, %v117
    %v119 = vpop.f32.mrb[0].mxu0
    %120 = vdwg.mxu0
    %121 = vset.pattern.permute.xlu0 1
    %122 = vperm.xlu0 %121, %v31
    %v123 = vpop.permute.xlu0 %122
    %v125 = vlaneseq
    %v126 = vshrl.u32 %v125, 7
    %v127 = vsub.s32 1, %v126
    %v128 = vrot.slane %v32, %v127
    %v129 = vmul.f32 %v123, %v128
    %v130 = vadd.f32 %v118, %v129
    %v131 = vld [vmem:[%s4] sm:$0x1]
    %v133 = vlaneseq
    %v134 = vshrl.u32 %v133, 7
    %v135 = vsub.s32 0, %v134
    %v136 = vrot.slane %v131, %v135
    %v138 = vadd.f32 %v130, %v136
    %v139 = vmax.f32 %v138, 0.0
    %v140 = vld [vmem:[%s5] sm:$0xff]
    %v141 = vld [vmem:[%s5 + $0x8] sm:$0xff]
    %v142 = vld [vmem:[%s5 + $0x10] sm:$0xff]
    %v143 = vld [vmem:[%s5 + $0x18] sm:$0xff]
    %v144 = vld [vmem:[%s5 + $0x20] sm:$0xff]
    %v145 = vld [vmem:[%s5 + $0x28] sm:$0xff]
    %v146 = vld [vmem:[%s5 + $0x30] sm:$0xff]
    %v147 = vld [vmem:[%s5 + $0x38] sm:$0xff]
    %v148 = vld [vmem:[%s5 + $0x40] sm:$0xff]
    %v149 = vld [vmem:[%s5 + $0x48] sm:$0xff]
    %v150 = vld [vmem:[%s5 + $0x50] sm:$0xff]
    %v151 = vld [vmem:[%s5 + $0x58] sm:$0xff]
    %v152 = vld [vmem:[%s5 + $0x60] sm:$0xff]
    %v153 = vld [vmem:[%s5 + $0x68] sm:$0xff]
    %v154 = vld [vmem:[%s5 + $0x70] sm:$0xff]
    %v155 = vld [vmem:[%s5 + $0x78] sm:$0xff]
    %v156 = vld [vmem:[%s6] sm:$0x1]
    %v158 = vlaneseq
    %v159 = vshrl.u32 %v158, 7
    %v160 = vsub.s32 0, %v159
    %v161 = vrot.slane %v156, %v160
    %163 = vmatprep.subr.mxu0 0.0
    %164 = vmatpush1.msra.mxu0 %v140
    %165 = vmatprep.subr.mxu0 0.0
    %166 = vmatpush1.msra.mxu0 %v141
    %167 = vmatprep.subr.mxu0 0.0
    %168 = vmatpush1.msra.mxu0 %v142
    %169 = vmatprep.subr.mxu0 0.0
    %170 = vmatpush1.msra.mxu0 %v143
    %171 = vmatprep.subr.mxu0 0.0
    %172 = vmatpush1.msra.mxu0 %v144
    %173 = vmatprep.subr.mxu0 0.0
    %174 = vmatpush1.msra.mxu0 %v145
    %175 = vmatprep.subr.mxu0 0.0
    %176 = vmatpush1.msra.mxu0 %v146
    %177 = vmatprep.subr.mxu0 0.0
    %178 = vmatpush1.msra.mxu0 %v147
    %179 = vmatprep.subr.mxu0 0.0
    %180 = vmatpush1.msra.mxu0 %v148
    %181 = vmatprep.subr.mxu0 0.0
    %182 = vmatpush1.msra.mxu0 %v149
    %183 = vmatprep.subr.mxu0 0.0
    %184 = vmatpush1.msra.mxu0 %v150
    %185 = vmatprep.subr.mxu0 0.0
    %186 = vmatpush1.msra.mxu0 %v151
    %187 = vmatprep.subr.mxu0 0.0
    %188 = vmatpush1.msra.mxu0 %v152
    %189 = vmatprep.subr.mxu0 0.0
    %190 = vmatpush1.msra.mxu0 %v153
    %191 = vmatprep.subr.mxu0 0.0
    %192 = vmatpush1.msra.mxu0 %v154
    %193 = vmatprep.subr.mxu0 0.0
    %194 = vmatpush1.msra.mxu0 %v155
    %195 = vmatprep.subr.mxu0 0.0
    %196 = vmatpush1.msra.mxu0 0.0
    %197 = vmatprep.subr.mxu0 0.0
    %198 = vmatpush1.msra.mxu0 0.0
    %199 = vmatprep.subr.mxu0 0.0
    %200 = vmatpush1.msra.mxu0 0.0
    %201 = vmatprep.subr.mxu0 0.0
    %202 = vmatpush1.msra.mxu0 0.0
    %203 = vmatprep.subr.mxu0 0.0
    %204 = vmatpush1.msra.mxu0 0.0
    %205 = vmatprep.subr.mxu0 0.0
    %206 = vmatpush1.msra.mxu0 0.0
    %207 = vmatprep.subr.mxu0 0.0
    %208 = vmatpush1.msra.mxu0 0.0
    %209 = vmatprep.subr.mxu0 0.0
    %210 = vmatpush1.msra.mxu0 0.0
    %211 = vmatprep.subr.mxu0 0.0
    %212 = vmatpush1.msra.mxu0 0.0
    %213 = vmatprep.subr.mxu0 0.0
    %214 = vmatpush1.msra.mxu0 0.0
    %215 = vmatprep.subr.mxu0 0.0
    %216 = vmatpush1.msra.mxu0 0.0
    %217 = vmatprep.subr.mxu0 0.0
    %218 = vmatpush1.msra.mxu0 0.0
    %219 = vmatprep.subr.mxu0 0.0
    %220 = vmatpush1.msra.mxu0 0.0
    %221 = vmatprep.subr.mxu0 0.0
    %222 = vmatpush1.msra.mxu0 0.0
    %223 = vmatprep.subr.mxu0 0.0
    %224 = vmatpush1.msra.mxu0 0.0
    %225 = vmatprep.subr.mxu0 0.0
    %226 = vmatpush1.msra.mxu0 0.0
    %227 = vmatprep.mubr.f32.mxu0 0.0
    %228 = vmatmul.mubr.f32.gmra.mrb[0].mxu0 %v139
    %v229 = vpop.f32.mrb[0].mxu0
    %v230 = vadd.f32 %v161, %v229
    %v231 = vpop.f32.mrb[0].mxu0
    %232 = vdwg.mxu0
    %v233 = vxor.u32 %v230, 2147483648
    %v234 = vmul.f32 %v233, 1.442695
    %v235 = vpow.pop %v234
    %v236 = vadd.f32 %v235, 1.0
    %v237 = vrcp.pop %v236
    %v238 = vmul.f32 1.0, %v237
    %vm239 = vcmask 261120
    %240 = vst.msk [vmem:[#allocation2] sm:$0xff] %vm239, %v238
    // Predicated region
    $region30: #{tpu_custom_call.1} parent=1 // pred_check
      _
    $region31: #{tpu_custom_call.1} parent=1 // pred_check_branch
      %242 = sbr.rel (0) target = $region33
    $region32: #{tpu_custom_call.1} parent=1 // pred_region
      %s244 = ssub.s32 128, 128
      %245 = vsyncadd [#allocation3], %s244
      %s247 = sshll.u32 [#allocation2], 4
      %s248 = int_to_ptr.vmem [resolvable:$true] %s247
      %250 = dma.vmem_to_hbm [thread:$0]  %s248, 128, %s7, [#allocation3]
    $region33: #{tpu_custom_call.1} parent=1 // pred_fallthru
      _
    // Predicated region
    $region34: #{tpu_custom_call.1} parent=1 // pred_check
      _
    $region35: #{tpu_custom_call.1} parent=1 // pred_check_branch
      %252 = sbr.rel (0) target = $region37
    $region36: #{tpu_custom_call.1} parent=1 // pred_region
      %253 = dma.done [#allocation3], 128
    $region37: #{tpu_custom_call.1} parent=1 // pred_fallthru
      _
    %254 = vsyncpa [#allocation3], 1

</llo_original>
